<compile_context>
chip_gen: v6e
topology: v6e:2x2x1
jax: 0.10.0
libtpu: 0.0.40
codegen_flags: <defaults>
</compile_context>

<pallas_src>
import jax
import jax.numpy as jnp
from jax.experimental import pallas as pl
from jax.experimental.pallas import tpu as pltpu


def _make_kernel(has_halo):
    """Build the kernel body.

    Refs (in order):
      x_ref          (nb, th, W)      centre row-tile of the input
      [top_ref]      (nb, 8,  W)      8-row block just above the tile
      [bot_ref]      (nb, 8,  W)      8-row block just below the tile
      o_ref          (nb, 9, th, W)   output block
      xbuf           (nb, th+2, W+2)  VMEM scratch: zero/halo-padded tile
    """

    def kernel(*refs):
        if has_halo:
            x_ref, top_ref, bot_ref, o_ref, xbuf = refs
        else:
            x_ref, o_ref, xbuf = refs
        nb, _, th, w = o_ref.shape

        # ---- assemble the zero/halo-padded tile in VMEM -------------------
        # (folds the conv's padding=1 into the kernel; x_ref and the halo
        # refs are auto-pipelined BlockSpec inputs, so nothing is exposed)
        xbuf[:, 1:th + 1, 1:w + 1] = x_ref[...]

        if has_halo:
            r = pl.program_id(1)
            # rows r*th - 1 and r*th + th from the neighbouring tiles ...
            xbuf[:, 0, 1:w + 1] = top_ref[:, 7, :]
            xbuf[:, th + 1, 1:w + 1] = bot_ref[:, 0, :]

            # ... replaced by the conv's zero padding at the image edges.
            @pl.when(r == 0)
            def _():
                xbuf[:, 0, 1:w + 1] = jnp.zeros((nb, w), jnp.float32)

            @pl.when(r == pl.num_programs(1) - 1)
            def _():
                xbuf[:, th + 1, 1:w + 1] = jnp.zeros((nb, w), jnp.float32)
        else:
            zrow = jnp.zeros((nb, w), jnp.float32)
            xbuf[:, 0, 1:w + 1] = zrow
            xbuf[:, th + 1, 1:w + 1] = zrow

        # left / right zero-padding columns (also zeroes the 4 corners)
        zcol = jnp.zeros((nb, th + 2), jnp.float32)
        xbuf[:, :, 0] = zcol
        xbuf[:, :, w + 1] = zcol

        # ---- 9 shifted copies: channel m = i*3+j is the padded tile shifted
        # by (i, j).  j-outer so the lane-shifted slab is shared by 3 rows.
        for j in range(3):
            col = xbuf[:, :, j:j + w]            # (nb, th+2, w)
            for i in range(3):
                o_ref[:, i * 3 + j] = col[:, i:i + th, :]

    return kernel


def _vmem_capacity_bytes():
    """Physical VMEM of the local TPU (128 MiB v5e/v6e, 64 MiB v7x)."""
    try:
        info = pltpu.get_tpu_info()
        for attr in ("vmem_capacity_bytes", "vmem_bytes", "vmem_size_bytes"):
            v = getattr(info, attr, None)
            if v:
                return int(v)
    except Exception:
        pass
    return 64 * 1024 * 1024          # conservative default (v7x size)


def fixed_conv2d(x, *, tile_h=None, batch_block=None,
                 vmem_budget_bytes=None, vmem_limit_bytes=None):
    """x: (N, 1, H, W) float32 -> (N, 9, H, W) float32 (== PyTorch FixedConv2D)."""
    N, C, H, W = x.shape
    assert C == 1, "FixedConv2D has in_channels == 1"
    x2 = x.astype(jnp.float32).reshape(N, H, W)

    # ---- per-generation VMEM budget ------------------------------------
    cap = _vmem_capacity_bytes()
    big_vmem = cap >= 96 * 1024 * 1024            # v5e / v6e (128 MiB physical)
    if vmem_limit_bytes is None:
        vmem_limit_bytes = 96 * 1024 * 1024 if big_vmem else 48 * 1024 * 1024
    if vmem_budget_bytes is None:
        vmem_budget_bytes = 56 * 1024 * 1024 if big_vmem else 36 * 1024 * 1024

    # VMEM resident per grid step: double-buffered output / input / halo
    # blocks plus the padded-tile scratch.
    def step_bytes(nb_, th_):
        out_b = 2 * nb_ * 9 * th_ * W * 4
        in_b = 2 * nb_ * th_ * W * 4
        halo_b = 2 * 2 * nb_ * 8 * W * 4
        buf_b = nb_ * (th_ + 2) * (W + 2) * 4
        return out_b + in_b + halo_b + buf_b

    # ---- batch block: largest divisor of N that fits at full H ----------
    if batch_block is not None:
        assert N % batch_block == 0, "batch_block must divide N"
        nb = int(batch_block)
    else:
        nb = 1
        for d in range(N, 0, -1):
            if N % d == 0 and step_bytes(d, H) <= vmem_budget_bytes:
                nb = d
                break

    # ---- row tile: must divide H exactly (no padded output + post-slice);
    # multiple of 8 unless it is the whole height -------------------------
    if tile_h is not None:
        th = int(tile_h)
        assert H % th == 0 and (th == H or th % 8 == 0), (
            "tile_h must divide H and be a multiple of 8 (or equal to H)")
    elif step_bytes(nb, H) <= vmem_budget_bytes:
        th = H
    else:
        th = None
        d = H - (H % 8)
        while d >= 8:
            if H % d == 0 and step_bytes(nb, d) <= vmem_budget_bytes:
                th = d
                break
            d -= 8
        if th is None:
            # TODO(synk): ragged-H row tiling (H too large for one tile and no
            # multiple-of-8 divisor) would need an in-kernel ragged output DMA.
            th = H

    # ---- make sure a non-trivial problem has >= 2 parallel grid steps so
    # both of v7x's TensorCores get work ----------------------------------
    if batch_block is None and tile_h is None:
        out_bytes = N * 9 * H * W * 4
        if (N // nb) * (H // th) == 1 and out_bytes >= 4 * 1024 * 1024:
            if N % 2 == 0 and N >= 2:
                nb = N // 2
            elif H % 16 == 0:
                th = H // 2

    n_h = H // th
    has_halo = n_h > 1
    grid = (N // nb, n_h)

    in_specs = [pl.BlockSpec((nb, th, W), lambda b, r: (b, r, 0))]
    inputs = [x2]
    if has_halo:
        th8 = th // 8
        last8 = H // 8 - 1
        # 8-row blocks containing the row just above / just below the tile
        # (clamped at the image edge; the kernel substitutes zeros there).
        in_specs.append(pl.BlockSpec(
            (nb, 8, W), lambda b, r: (b, jnp.maximum(r * th8 - 1, 0), 0)))
        in_specs.append(pl.BlockSpec(
            (nb, 8, W), lambda b, r: (b, jnp.minimum(r * th8 + th8, last8), 0)))
        inputs += [x2, x2]

    return pl.pallas_call(
        _make_kernel(has_halo),
        out_shape=jax.ShapeDtypeStruct((N, 9, H, W), jnp.float32),
        grid=grid,
        in_specs=in_specs,
        out_specs=pl.BlockSpec((nb, 9, th, W), lambda b, r: (b, 0, r, 0)),
        scratch_shapes=[pltpu.VMEM((nb, th + 2, W + 2), jnp.float32)],
        compiler_params=pltpu.CompilerParams(
            dimension_semantics=("parallel", "parallel"),
            vmem_limit_bytes=vmem_limit_bytes,
        ),
    )(*inputs)


def _reference(x):
    # Pure-JAX reference: out[n, i*3+j] = zero-padded input shifted by (i, j).
    N, _, H, W = x.shape
    xpad = jnp.pad(x[:, 0].astype(jnp.float32), ((0, 0), (1, 1), (1, 1)))
    return jnp.stack([xpad[:, i:i + H, j:j + W]
                      for i in range(3) for j in range(3)], axis=1)


if __name__ == "__main__":
    key = jax.random.PRNGKey(0)

    # Primary small case (the module fixes in_channels=1, out_channels=9).
    x = jax.random.normal(key, (2, 1, 16, 16), dtype=jnp.float32)
    out = jax.block_until_ready(fixed_conv2d(x))
    ref = _reference(x)
    assert out.shape == (2, 9, 16, 16)
    assert jnp.allclose(out, ref, atol=1e-6, rtol=1e-6)

    # Row-tiled path with halo BlockSpecs (grid (2, 2)).
    out2 = jax.block_until_ready(fixed_conv2d(x, tile_h=8, batch_block=1))
    assert jnp.allclose(out2, ref, atol=1e-6, rtol=1e-6)

    # Non-power-of-two H/W, single row tile (no halo path).
    x3 = jax.random.normal(jax.random.PRNGKey(0), (1, 1, 60, 40), dtype=jnp.float32)
    out3 = jax.block_until_ready(fixed_conv2d(x3))
    assert out3.shape == (1, 9, 60, 40)
    assert jnp.allclose(out3, _reference(x3), atol=1e-6, rtol=1e-6)

    # Larger case: exercises auto tile selection and the ">= 2 parallel grid
    # steps" nudge (output ~4.5 MiB).
    x4 = jax.random.normal(jax.random.PRNGKey(1), (2, 1, 256, 256), dtype=jnp.float32)
    out4 = jax.block_until_ready(fixed_conv2d(x4))
    assert out4.shape == (2, 9, 256, 256)
    assert jnp.allclose(out4, _reference(x4), atol=1e-6, rtol=1e-6)

    print("KERNEL_OK")
</pallas_src>

<mosaic_0001>
module attributes {stable_mosaic.version = 11 : i64} {
  func.func @kernel(%arg0: i32, %arg1: i32, %arg2: memref<2x16x16xf32, #tpu.memory_space<vmem>>, %arg3: memref<2x9x16x16xf32, #tpu.memory_space<vmem>>, %arg4: memref<2x18x18xf32, #tpu.memory_space<vmem>>) attributes {dimension_semantics = [#tpu.dimension_semantics<parallel>, #tpu.dimension_semantics<parallel>], iteration_bounds = array<i64: 1, 1>, scalar_prefetch = 0 : i64, scratch_operands = 1 : i64, tpu.core_type = #tpu.core_type<tc>, window_params = [{transform_indices = @transform_0, window_bounds = array<i64: 2, 16, 16>}, {transform_indices = @transform_1, window_bounds = array<i64: 2, 9, 16, 16>}]} {
    %c0 = arith.constant 0 : index
    %c0_0 = arith.constant 0 : index
    %c0_1 = arith.constant 0 : index
    %0 = vector.load %arg2[%c0, %c0_0, %c0_1] : memref<2x16x16xf32, #tpu.memory_space<vmem>>, vector<2x16x16xf32>
    %c0_2 = arith.constant 0 : index
    %c1 = arith.constant 1 : index
    %c1_3 = arith.constant 1 : index
    %1 = vector.load %arg4[%c0_2, %c1, %c1_3] : memref<2x18x18xf32, #tpu.memory_space<vmem>>, vector<2x16x16xf32>
    tpu.vector_store %arg4[%c0_2, %c1, %c1_3], %0 {strides = array<i32>} : memref<2x18x18xf32, #tpu.memory_space<vmem>>, vector<2x16x16xf32>,
    %cst = arith.constant 0.000000e+00 : f32
    %2 = vector.broadcast %cst : f32 to vector<2x16xf32>
    %c0_4 = arith.constant 0 : index
    %c0_5 = arith.constant 0 : index
    %c1_6 = arith.constant 1 : index
    %3 = vector.load %arg4[%c0_4, %c0_5, %c1_6] : memref<2x18x18xf32, #tpu.memory_space<vmem>>, vector<2x1x16xf32>
    %4 = vector.shape_cast %3 : vector<2x1x16xf32> to vector<2x16xf32>
    %5 = vector.shape_cast %2 : vector<2x16xf32> to vector<2x1x16xf32>
    tpu.vector_store %arg4[%c0_4, %c0_5, %c1_6], %5 {strides = array<i32>} : memref<2x18x18xf32, #tpu.memory_space<vmem>>, vector<2x1x16xf32>,
    %c0_7 = arith.constant 0 : index
    %c17 = arith.constant 17 : index
    %c1_8 = arith.constant 1 : index
    %6 = vector.load %arg4[%c0_7, %c17, %c1_8] : memref<2x18x18xf32, #tpu.memory_space<vmem>>, vector<2x1x16xf32>
    %7 = vector.shape_cast %6 : vector<2x1x16xf32> to vector<2x16xf32>
    %8 = vector.shape_cast %2 : vector<2x16xf32> to vector<2x1x16xf32>
    tpu.vector_store %arg4[%c0_7, %c17, %c1_8], %8 {strides = array<i32>} : memref<2x18x18xf32, #tpu.memory_space<vmem>>, vector<2x1x16xf32>,
    %cst_9 = arith.constant 0.000000e+00 : f32
    %9 = vector.broadcast %cst_9 : f32 to vector<2x18xf32>
    %c0_10 = arith.constant 0 : index
    %c0_11 = arith.constant 0 : index
    %c0_12 = arith.constant 0 : index
    %10 = vector.load %arg4[%c0_10, %c0_11, %c0_12] : memref<2x18x18xf32, #tpu.memory_space<vmem>>, vector<2x18x1xf32>
    %11 = vector.shape_cast %10 : vector<2x18x1xf32> to vector<2x18xf32>
    %12 = vector.shape_cast %9 : vector<2x18xf32> to vector<2x18x1xf32>
    tpu.vector_store %arg4[%c0_10, %c0_11, %c0_12], %12 {strides = array<i32>} : memref<2x18x18xf32, #tpu.memory_space<vmem>>, vector<2x18x1xf32>,
    %c0_13 = arith.constant 0 : index
    %c0_14 = arith.constant 0 : index
    %c17_15 = arith.constant 17 : index
    %13 = vector.load %arg4[%c0_13, %c0_14, %c17_15] : memref<2x18x18xf32, #tpu.memory_space<vmem>>, vector<2x18x1xf32>
    %14 = vector.shape_cast %13 : vector<2x18x1xf32> to vector<2x18xf32>
    %15 = vector.shape_cast %9 : vector<2x18xf32> to vector<2x18x1xf32>
    tpu.vector_store %arg4[%c0_13, %c0_14, %c17_15], %15 {strides = array<i32>} : memref<2x18x18xf32, #tpu.memory_space<vmem>>, vector<2x18x1xf32>,
    %c0_16 = arith.constant 0 : index
    %c0_17 = arith.constant 0 : index
    %c0_18 = arith.constant 0 : index
    %16 = vector.load %arg4[%c0_16, %c0_17, %c0_18] : memref<2x18x18xf32, #tpu.memory_space<vmem>>, vector<2x18x16xf32>
    %17 = vector.extract_strided_slice %16 {offsets = [0, 0, 0], sizes = [2, 16, 16], strides = [1, 1, 1]} : vector<2x18x16xf32> to vector<2x16x16xf32>
    %c0_19 = arith.constant 0 : index
    %c0_20 = arith.constant 0 : index
    %c0_21 = arith.constant 0 : index
    %c0_22 = arith.constant 0 : index
    %18 = vector.load %arg3[%c0_19, %c0_20, %c0_21, %c0_22] : memref<2x9x16x16xf32, #tpu.memory_space<vmem>>, vector<2x1x16x16xf32>
    %19 = vector.shape_cast %18 : vector<2x1x16x16xf32> to vector<2x16x16xf32>
    %20 = vector.shape_cast %17 : vector<2x16x16xf32> to vector<2x1x16x16xf32>
    tpu.vector_store %arg3[%c0_19, %c0_20, %c0_21, %c0_22], %20 {strides = array<i32>} : memref<2x9x16x16xf32, #tpu.memory_space<vmem>>, vector<2x1x16x16xf32>,
    %21 = vector.extract_strided_slice %16 {offsets = [0, 1, 0], sizes = [2, 16, 16], strides = [1, 1, 1]} : vector<2x18x16xf32> to vector<2x16x16xf32>
    %c0_23 = arith.constant 0 : index
    %c3 = arith.constant 3 : index
    %c0_24 = arith.constant 0 : index
    %c0_25 = arith.constant 0 : index
    %22 = vector.load %arg3[%c0_23, %c3, %c0_24, %c0_25] : memref<2x9x16x16xf32, #tpu.memory_space<vmem>>, vector<2x1x16x16xf32>
    %23 = vector.shape_cast %22 : vector<2x1x16x16xf32> to vector<2x16x16xf32>
    %24 = vector.shape_cast %21 : vector<2x16x16xf32> to vector<2x1x16x16xf32>
    tpu.vector_store %arg3[%c0_23, %c3, %c0_24, %c0_25], %24 {strides = array<i32>} : memref<2x9x16x16xf32, #tpu.memory_space<vmem>>, vector<2x1x16x16xf32>,
    %25 = vector.extract_strided_slice %16 {offsets = [0, 2, 0], sizes = [2, 16, 16], strides = [1, 1, 1]} : vector<2x18x16xf32> to vector<2x16x16xf32>
    %c0_26 = arith.constant 0 : index
    %c6 = arith.constant 6 : index
    %c0_27 = arith.constant 0 : index
    %c0_28 = arith.constant 0 : index
    %26 = vector.load %arg3[%c0_26, %c6, %c0_27, %c0_28] : memref<2x9x16x16xf32, #tpu.memory_space<vmem>>, vector<2x1x16x16xf32>
    %27 = vector.shape_cast %26 : vector<2x1x16x16xf32> to vector<2x16x16xf32>
    %28 = vector.shape_cast %25 : vector<2x16x16xf32> to vector<2x1x16x16xf32>
    tpu.vector_store %arg3[%c0_26, %c6, %c0_27, %c0_28], %28 {strides = array<i32>} : memref<2x9x16x16xf32, #tpu.memory_space<vmem>>, vector<2x1x16x16xf32>,
    %c0_29 = arith.constant 0 : index
    %c0_30 = arith.constant 0 : index
    %c1_31 = arith.constant 1 : index
    %29 = vector.load %arg4[%c0_29, %c0_30, %c1_31] : memref<2x18x18xf32, #tpu.memory_space<vmem>>, vector<2x18x16xf32>
    %30 = vector.extract_strided_slice %29 {offsets = [0, 0, 0], sizes = [2, 16, 16], strides = [1, 1, 1]} : vector<2x18x16xf32> to vector<2x16x16xf32>
    %c0_32 = arith.constant 0 : index
    %c1_33 = arith.constant 1 : index
    %c0_34 = arith.constant 0 : index
    %c0_35 = arith.constant 0 : index
    %31 = vector.load %arg3[%c0_32, %c1_33, %c0_34, %c0_35] : memref<2x9x16x16xf32, #tpu.memory_space<vmem>>, vector<2x1x16x16xf32>
    %32 = vector.shape_cast %31 : vector<2x1x16x16xf32> to vector<2x16x16xf32>
    %33 = vector.shape_cast %30 : vector<2x16x16xf32> to vector<2x1x16x16xf32>
    tpu.vector_store %arg3[%c0_32, %c1_33, %c0_34, %c0_35], %33 {strides = array<i32>} : memref<2x9x16x16xf32, #tpu.memory_space<vmem>>, vector<2x1x16x16xf32>,
    %34 = vector.extract_strided_slice %29 {offsets = [0, 1, 0], sizes = [2, 16, 16], strides = [1, 1, 1]} : vector<2x18x16xf32> to vector<2x16x16xf32>
    %c0_36 = arith.constant 0 : index
    %c4 = arith.constant 4 : index
    %c0_37 = arith.constant 0 : index
    %c0_38 = arith.constant 0 : index
    %35 = vector.load %arg3[%c0_36, %c4, %c0_37, %c0_38] : memref<2x9x16x16xf32, #tpu.memory_space<vmem>>, vector<2x1x16x16xf32>
    %36 = vector.shape_cast %35 : vector<2x1x16x16xf32> to vector<2x16x16xf32>
    %37 = vector.shape_cast %34 : vector<2x16x16xf32> to vector<2x1x16x16xf32>
    tpu.vector_store %arg3[%c0_36, %c4, %c0_37, %c0_38], %37 {strides = array<i32>} : memref<2x9x16x16xf32, #tpu.memory_space<vmem>>, vector<2x1x16x16xf32>,
    %38 = vector.extract_strided_slice %29 {offsets = [0, 2, 0], sizes = [2, 16, 16], strides = [1, 1, 1]} : vector<2x18x16xf32> to vector<2x16x16xf32>
    %c0_39 = arith.constant 0 : index
    %c7 = arith.constant 7 : index
    %c0_40 = arith.constant 0 : index
    %c0_41 = arith.constant 0 : index
    %39 = vector.load %arg3[%c0_39, %c7, %c0_40, %c0_41] : memref<2x9x16x16xf32, #tpu.memory_space<vmem>>, vector<2x1x16x16xf32>
    %40 = vector.shape_cast %39 : vector<2x1x16x16xf32> to vector<2x16x16xf32>
    %41 = vector.shape_cast %38 : vector<2x16x16xf32> to vector<2x1x16x16xf32>
    tpu.vector_store %arg3[%c0_39, %c7, %c0_40, %c0_41], %41 {strides = array<i32>} : memref<2x9x16x16xf32, #tpu.memory_space<vmem>>, vector<2x1x16x16xf32>,
    %c0_42 = arith.constant 0 : index
    %c0_43 = arith.constant 0 : index
    %c2 = arith.constant 2 : index
    %42 = vector.load %arg4[%c0_42, %c0_43, %c2] : memref<2x18x18xf32, #tpu.memory_space<vmem>>, vector<2x18x16xf32>
    %43 = vector.extract_strided_slice %42 {offsets = [0, 0, 0], sizes = [2, 16, 16], strides = [1, 1, 1]} : vector<2x18x16xf32> to vector<2x16x16xf32>
    %c0_44 = arith.constant 0 : index
    %c2_45 = arith.constant 2 : index
    %c0_46 = arith.constant 0 : index
    %c0_47 = arith.constant 0 : index
    %44 = vector.load %arg3[%c0_44, %c2_45, %c0_46, %c0_47] : memref<2x9x16x16xf32, #tpu.memory_space<vmem>>, vector<2x1x16x16xf32>
    %45 = vector.shape_cast %44 : vector<2x1x16x16xf32> to vector<2x16x16xf32>
    %46 = vector.shape_cast %43 : vector<2x16x16xf32> to vector<2x1x16x16xf32>
    tpu.vector_store %arg3[%c0_44, %c2_45, %c0_46, %c0_47], %46 {strides = array<i32>} : memref<2x9x16x16xf32, #tpu.memory_space<vmem>>, vector<2x1x16x16xf32>,
    %47 = vector.extract_strided_slice %42 {offsets = [0, 1, 0], sizes = [2, 16, 16], strides = [1, 1, 1]} : vector<2x18x16xf32> to vector<2x16x16xf32>
    %c0_48 = arith.constant 0 : index
    %c5 = arith.constant 5 : index
    %c0_49 = arith.constant 0 : index
    %c0_50 = arith.constant 0 : index
    %48 = vector.load %arg3[%c0_48, %c5, %c0_49, %c0_50] : memref<2x9x16x16xf32, #tpu.memory_space<vmem>>, vector<2x1x16x16xf32>
    %49 = vector.shape_cast %48 : vector<2x1x16x16xf32> to vector<2x16x16xf32>
    %50 = vector.shape_cast %47 : vector<2x16x16xf32> to vector<2x1x16x16xf32>
    tpu.vector_store %arg3[%c0_48, %c5, %c0_49, %c0_50], %50 {strides = array<i32>} : memref<2x9x16x16xf32, #tpu.memory_space<vmem>>, vector<2x1x16x16xf32>,
    %51 = vector.extract_strided_slice %42 {offsets = [0, 2, 0], sizes = [2, 16, 16], strides = [1, 1, 1]} : vector<2x18x16xf32> to vector<2x16x16xf32>
    %c0_51 = arith.constant 0 : index
    %c8 = arith.constant 8 : index
    %c0_52 = arith.constant 0 : index
    %c0_53 = arith.constant 0 : index
    %52 = vector.load %arg3[%c0_51, %c8, %c0_52, %c0_53] : memref<2x9x16x16xf32, #tpu.memory_space<vmem>>, vector<2x1x16x16xf32>
    %53 = vector.shape_cast %52 : vector<2x1x16x16xf32> to vector<2x16x16xf32>
    %54 = vector.shape_cast %51 : vector<2x16x16xf32> to vector<2x1x16x16xf32>
    tpu.vector_store %arg3[%c0_51, %c8, %c0_52, %c0_53], %54 {strides = array<i32>} : memref<2x9x16x16xf32, #tpu.memory_space<vmem>>, vector<2x1x16x16xf32>,
    return
  }
  func.func @transform_0(%arg0: i32, %arg1: i32) -> (i32, i32, i32) {
    %c0_i32 = arith.constant 0 : i32
    %c0_i32_0 = arith.constant 0 : i32
    return %arg0, %arg1, %c0_i32 : i32, i32, i32
  }
  func.func @transform_1(%arg0: i32, %arg1: i32) -> (i32, i32, i32, i32) {
    %c0_i32 = arith.constant 0 : i32
    %c0_i32_0 = arith.constant 0 : i32
    %c0_i32_1 = arith.constant 0 : i32
    return %arg0, %c0_i32, %arg1, %c0_i32_0 : i32, i32, i32, i32
  }
}

</mosaic_0001>

<llo_original>
// kernel: tpu_custom_call.1
$region0: #{tpu_custom_call.1}
  #allocation0 [shape = 'u32[]', space=smem, size = 0x4, offset = 0x4, fixed_abs, tag = 'smem constant byte address 0x4 - core index']
  #allocation1 [shape = 'u32[144,128]{1,0:T(1,128)}', space=vmem, size = 0x12000, scoped, tag = 'internal scratch']
  #allocation2 [shape = 'f32[2,18,18]{2,1,0:T(8,128)}', space=vmem, size = 0x6000, scoped, tag = 'scratch operand']
  %s0 = inlined_call_operand.hbm [shape: f32[2,16,16], index: 0, kind: input, shape index: {}]
  %s1 = inlined_call_operand.hbm [shape: f32[2,9,16,16], index: 1, kind: output, shape index: {}]
  %s2 = sld [smem:[#allocation0]]
  $region18: #{tpu_custom_call.1} parent=0
    _
  %s4 = ssub.s32 1, %s2
  %s5 = scalar_select 0, %s4, %s2
  $region1: #{tpu_custom_call.1} parent=0
    #allocation3 [shape = 'u8[16384]{0}', space=vmem, size = 0x4000, scoped, tag = 'input window, operand 0, single buffered']
    #allocation4 [shape = 's32[1]{0}', space=sflag, size = 0x4, scoped, tag = 'scoped memory for tpu_custom_call.1']
    #allocation5 [shape = 's32[1]{0}', space=sflag, size = 0x4, scoped, tag = 'scoped memory for tpu_custom_call.1']
    #allocation6 [shape = 'u8[147456]{0}', space=vmem, size = 0x24000, scoped, tag = 'output window, operand 0, single buffered']
    %6 = vsyncpa [#allocation4], 0
    %7 = vsyncpa [#allocation5], 0
    // Predicated region
    $region2: #{tpu_custom_call.1} parent=1 // pred_check
      _
    $region3: #{tpu_custom_call.1} parent=1 // pred_check_branch
      %9 = sbr.rel (0) target = $region5
    $region4: #{tpu_custom_call.1} parent=1 // pred_region
      %s11 = ssub.s32 512, 512
      %12 = vsyncadd [#allocation4], %s11
      %s13 = sshll.u32 [#allocation3], 4
      %s14 = int_to_ptr.vmem [resolvable:$true] %s13
      %19 = dma.hbm_to_vmem [thread:$0]  %s0, 512, %s14, [#allocation4], 128, 128, 8
    $region5: #{tpu_custom_call.1} parent=1 // pred_fallthru
      _
    // Predicated region
    $region6: #{tpu_custom_call.1} parent=1 // pred_check
      _
    $region7: #{tpu_custom_call.1} parent=1 // pred_check_branch
      %21 = sbr.rel (0) target = $region9
    $region8: #{tpu_custom_call.1} parent=1 // pred_region
      %22 = dma.done [#allocation4], 512
    $region9: #{tpu_custom_call.1} parent=1 // pred_fallthru
      _
    %v23 = vld [vmem:[#allocation3] sm:$0xff]
    %v24 = vld [vmem:[#allocation3 + $0x8] sm:$0xff]
    %v25 = vld [vmem:[#allocation3 + $0x10] sm:$0xff]
    %v26 = vld [vmem:[#allocation3 + $0x18] sm:$0xff]
    %31 = vrot.lane.b32.xlu0 %v23, 1
    %v32 = vpop.permute.xlu0 %31
    %33 = vrot.lane.b32.xlu0 %v24, 1
    %v34 = vpop.permute.xlu0 %33
    %35 = vrot.lane.b32.xlu0 %v25, 1
    %v36 = vpop.permute.xlu0 %35
    %37 = vrot.lane.b32.xlu0 %v26, 1
    %v38 = vpop.permute.xlu0 %37
    %vm43 = vcmask 138248
    %44 = vst.msk [vmem:[#allocation2 + $0x1] sm:$0xff] %vm43, %v32
    %45 = vst.msk [vmem:[#allocation2 + $0x9] sm:$0xff] %vm43, %v34
    %46 = vst.msk [vmem:[#allocation2 + $0x19] sm:$0xff] %vm43, %v36
    %47 = vst.msk [vmem:[#allocation2 + $0x21] sm:$0xff] %vm43, %v38
    %vm48 = vcmask 131080
    %49 = vst.msk [vmem:[#allocation2] sm:$0x1] %vm48, 0.0
    %50 = vst.msk [vmem:[#allocation2 + $0x18] sm:$0x1] %vm48, 0.0
    %51 = vst.msk [vmem:[#allocation2 + $0x11] sm:$0x1] %vm48, 0.0
    %52 = vst.msk [vmem:[#allocation2 + $0x29] sm:$0x1] %vm48, 0.0
    %vm53 = vcmask 7168
    %54 = vst.msk [vmem:[#allocation2] sm:$0xff] %vm53, 0.0
    %55 = vst.msk [vmem:[#allocation2 + $0x8] sm:$0xff] %vm53, 0.0
    %vm56 = vcmask 1024
    %57 = vst.msk [vmem:[#allocation2 + $0x10] sm:$0x3] %vm56, 0.0
    %58 = vst.msk [vmem:[#allocation2 + $0x18] sm:$0xff] %vm53, 0.0
    %59 = vst.msk [vmem:[#allocation2 + $0x20] sm:$0xff] %vm53, 0.0
    %60 = vst.msk [vmem:[#allocation2 + $0x28] sm:$0x3] %vm56, 0.0
    %vm61 = vcmask 146568
    %62 = vst.msk [vmem:[#allocation2] sm:$0xff] %vm61, 0.0
    %63 = vst.msk [vmem:[#allocation2 + $0x8] sm:$0xff] %vm61, 0.0
    %vm64 = vcmask 140424
    %65 = vst.msk [vmem:[#allocation2 + $0x10] sm:$0x3] %vm64, 0.0
    %66 = vst.msk [vmem:[#allocation2 + $0x18] sm:$0xff] %vm61, 0.0
    %67 = vst.msk [vmem:[#allocation2 + $0x20] sm:$0xff] %vm61, 0.0
    %68 = vst.msk [vmem:[#allocation2 + $0x28] sm:$0x3] %vm64, 0.0
    %v69 = vld [vmem:[#allocation2] sm:$0xff]
    %v70 = vld [vmem:[#allocation2 + $0x8] sm:$0xff]
    %v71 = vld [vmem:[#allocation2 + $0x10] sm:$0x3]
    %v72 = vld [vmem:[#allocation2 + $0x18] sm:$0xff]
    %v73 = vld [vmem:[#allocation2 + $0x20] sm:$0xff]
    %v74 = vld [vmem:[#allocation2 + $0x28] sm:$0x3]
    %vm75 = vcmask 130048
    %76 = vst.msk [vmem:[#allocation6] sm:$0xff] %vm75, %v69
    %77 = vst.msk [vmem:[#allocation6 + $0x8] sm:$0xff] %vm75, %v70
    %78 = vst.msk [vmem:[#allocation6 + $0x90] sm:$0xff] %vm75, %v72
    %79 = vst.msk [vmem:[#allocation6 + $0x98] sm:$0xff] %vm75, %v73
    %s80 = scalar_lea.vmem [#allocation6], 48
    %vm81 = vcmask 130049
    %82 = vst.msk [vmem:[%s80 - $0x1] sm:$0xfe] %vm81, %v69
    %83 = vst.msk [vmem:[%s80 + $0x7] sm:$0xff] %vm75, %v70
    %vm84 = vcmask 122880
    %85 = vst.msk [vmem:[%s80 + $0xf] sm:$0x1] %vm84, %v71
    %86 = vst.msk [vmem:[%s80 + $0x8f] sm:$0xfe] %vm81, %v72
    %87 = vst.msk [vmem:[%s80 + $0x97] sm:$0xff] %vm75, %v73
    %88 = vst.msk [vmem:[%s80 + $0x9f] sm:$0x1] %vm84, %v74
    %s89 = scalar_lea.vmem [#allocation6], 96
    %vm90 = vcmask 130050
    %91 = vst.msk [vmem:[%s89 - $0x2] sm:$0xfc] %vm90, %v69
    %92 = vst.msk [vmem:[%s89 + $0x6] sm:$0xff] %vm75, %v70
    %vm93 = vcmask 123904
    %94 = vst.msk [vmem:[%s89 + $0xe] sm:$0x3] %vm93, %v71
    %95 = vst.msk [vmem:[%s89 + $0x8e] sm:$0xfc] %vm90, %v72
    %96 = vst.msk [vmem:[%s89 + $0x96] sm:$0xff] %vm75, %v73
    %97 = vst.msk [vmem:[%s89 + $0x9e] sm:$0x3] %vm93, %v74
    %v98 = vld [vmem:[#allocation2] sm:$0xff]
    %v99 = vld [vmem:[#allocation2 + $0x8] sm:$0xff]
    %v100 = vld [vmem:[#allocation2 + $0x10] sm:$0x3]
    %v101 = vld [vmem:[#allocation2 + $0x18] sm:$0xff]
    %v102 = vld [vmem:[#allocation2 + $0x20] sm:$0xff]
    %v103 = vld [vmem:[#allocation2 + $0x28] sm:$0x3]
    %108 = vrot.lane.b32.xlu0 %v98, 127
    %v109 = vpop.permute.xlu0 %108
    %110 = vrot.lane.b32.xlu0 %v99, 127
    %v111 = vpop.permute.xlu0 %110
    %112 = vrot.lane.b32.xlu0 %v101, 127
    %v113 = vpop.permute.xlu0 %112
    %114 = vrot.lane.b32.xlu0 %v102, 127
    %v115 = vpop.permute.xlu0 %114
    %s120 = scalar_lea.vmem [#allocation6], 16
    %121 = vst.msk [vmem:[%s120] sm:$0xff] %vm75, %v109
    %122 = vst.msk [vmem:[%s120 + $0x8] sm:$0xff] %vm75, %v111
    %123 = vst.msk [vmem:[%s120 + $0x90] sm:$0xff] %vm75, %v113
    %124 = vst.msk [vmem:[%s120 + $0x98] sm:$0xff] %vm75, %v115
    %127 = vrot.lane.b32.xlu0 %v100, 127
    %v128 = vpop.permute.xlu0 %127
    %129 = vrot.lane.b32.xlu0 %v103, 127
    %v130 = vpop.permute.xlu0 %129
    %s133 = scalar_lea.vmem [#allocation6], 64
    %134 = vst.msk [vmem:[%s133 - $0x1] sm:$0xfe] %vm81, %v109
    %135 = vst.msk [vmem:[%s133 + $0x7] sm:$0xff] %vm75, %v111
    %136 = vst.msk [vmem:[%s133 + $0xf] sm:$0x1] %vm84, %v128
    %137 = vst.msk [vmem:[%s133 + $0x8f] sm:$0xfe] %vm81, %v113
    %138 = vst.msk [vmem:[%s133 + $0x97] sm:$0xff] %vm75, %v115
    %139 = vst.msk [vmem:[%s133 + $0x9f] sm:$0x1] %vm84, %v130
    %s140 = scalar_lea.vmem [#allocation6], 112
    %141 = vst.msk [vmem:[%s140 - $0x2] sm:$0xfc] %vm90, %v109
    %142 = vst.msk [vmem:[%s140 + $0x6] sm:$0xff] %vm75, %v111
    %143 = vst.msk [vmem:[%s140 + $0xe] sm:$0x3] %vm93, %v128
    %144 = vst.msk [vmem:[%s140 + $0x8e] sm:$0xfc] %vm90, %v113
    %145 = vst.msk [vmem:[%s140 + $0x96] sm:$0xff] %vm75, %v115
    %146 = vst.msk [vmem:[%s140 + $0x9e] sm:$0x3] %vm93, %v130
    %v147 = vld [vmem:[#allocation2] sm:$0xff]
    %v148 = vld [vmem:[#allocation2 + $0x8] sm:$0xff]
    %v149 = vld [vmem:[#allocation2 + $0x10] sm:$0x3]
    %v150 = vld [vmem:[#allocation2 + $0x18] sm:$0xff]
    %v151 = vld [vmem:[#allocation2 + $0x20] sm:$0xff]
    %v152 = vld [vmem:[#allocation2 + $0x28] sm:$0x3]
    %157 = vrot.lane.b32.xlu0 %v147, 126
    %v158 = vpop.permute.xlu0 %157
    %159 = vrot.lane.b32.xlu0 %v148, 126
    %v160 = vpop.permute.xlu0 %159
    %161 = vrot.lane.b32.xlu0 %v150, 126
    %v162 = vpop.permute.xlu0 %161
    %163 = vrot.lane.b32.xlu0 %v151, 126
    %v164 = vpop.permute.xlu0 %163
    %s169 = scalar_lea.vmem [#allocation6], 32
    %170 = vst.msk [vmem:[%s169] sm:$0xff] %vm75, %v158
    %171 = vst.msk [vmem:[%s169 + $0x8] sm:$0xff] %vm75, %v160
    %172 = vst.msk [vmem:[%s169 + $0x90] sm:$0xff] %vm75, %v162
    %173 = vst.msk [vmem:[%s169 + $0x98] sm:$0xff] %vm75, %v164
    %176 = vrot.lane.b32.xlu0 %v149, 126
    %v177 = vpop.permute.xlu0 %176
    %178 = vrot.lane.b32.xlu0 %v152, 126
    %v179 = vpop.permute.xlu0 %178
    %s182 = scalar_lea.vmem [#allocation6], 80
    %183 = vst.msk [vmem:[%s182 - $0x1] sm:$0xfe] %vm81, %v158
    %184 = vst.msk [vmem:[%s182 + $0x7] sm:$0xff] %vm75, %v160
    %185 = vst.msk [vmem:[%s182 + $0xf] sm:$0x1] %vm84, %v177
    %186 = vst.msk [vmem:[%s182 + $0x8f] sm:$0xfe] %vm81, %v162
    %187 = vst.msk [vmem:[%s182 + $0x97] sm:$0xff] %vm75, %v164
    %188 = vst.msk [vmem:[%s182 + $0x9f] sm:$0x1] %vm84, %v179
    %s189 = scalar_lea.vmem [#allocation6], 128
    %190 = vst.msk [vmem:[%s189 - $0x2] sm:$0xfc] %vm90, %v158
    %191 = vst.msk [vmem:[%s189 + $0x6] sm:$0xff] %vm75, %v160
    %192 = vst.msk [vmem:[%s189 + $0xe] sm:$0x3] %vm93, %v177
    %193 = vst.msk [vmem:[%s189 + $0x8e] sm:$0xfc] %vm90, %v162
    %194 = vst.msk [vmem:[%s189 + $0x96] sm:$0xff] %vm75, %v164
    %195 = vst.msk [vmem:[%s189 + $0x9e] sm:$0x3] %vm93, %v179
    // Predicated region
    $region10: #{tpu_custom_call.1} parent=1 // pred_check
      _
    $region11: #{tpu_custom_call.1} parent=1 // pred_check_branch
      %197 = sbr.rel (0) target = $region13
    $region12: #{tpu_custom_call.1} parent=1 // pred_region
      %s199 = ssub.s32 4608, 4608
      %200 = vsyncadd [#allocation5], %s199
      %s201 = sshll.u32 [#allocation6], 4
      %s202 = int_to_ptr.vmem [resolvable:$true] %s201
      %207 = dma.vmem_to_hbm [thread:$0]  %s202, 4608, %s1, [#allocation5], 128, 128, 8
    $region13: #{tpu_custom_call.1} parent=1 // pred_fallthru
      _
    // Predicated region
    $region14: #{tpu_custom_call.1} parent=1 // pred_check
      _
    $region15: #{tpu_custom_call.1} parent=1 // pred_check_branch
      %209 = sbr.rel (0) target = $region17
    $region16: #{tpu_custom_call.1} parent=1 // pred_region
      %210 = dma.done [#allocation5], 4608
    $region17: #{tpu_custom_call.1} parent=1 // pred_fallthru
      _
    %211 = vsyncpa [#allocation4], 1
    %212 = vsyncpa [#allocation5], 1

</llo_original>
